<compile_context>
chip_gen: v7x
topology: tpu7x:2x2x1
jax: 0.10.0
libtpu: 0.0.40
codegen_flags: <defaults>
</compile_context>

<pallas_src>
import functools

import numpy as np
import jax
import jax.numpy as jnp
from jax.experimental import pallas as pl
from jax.experimental.pallas import tpu as pltpu


def _round_up(x, m):
    return ((x + m - 1) // m) * m


def _ceil_div(a, b):
    return (a + b - 1) // b


def batch_edge_kernel(starts_ref,            # scalar-prefetch: (B,) int32 graph start rows (SMEM)
                      h_ref, eproj_ref,
                      w1h_ref,
                      w2_ref, b2_ref,
                      w3_ref, b3_ref,
                      out_ref,
                      *, num_graphs, tile_n):
    # Recover each row's graph id from the tile's global row index vs. the
    # per-graph start offsets (nodes are contiguous per graph), then add the
    # per-graph Dense1-embedding contribution via a tiny on-chip one-hot
    # matmul against the VMEM-resident (B, 2H) e_proj table.
    row0 = pl.program_id(0) * tile_n
    rows = row0 + jax.lax.broadcasted_iota(jnp.int32, (tile_n, 1), 0)
    gid = jnp.zeros((tile_n, 1), jnp.int32)
    for g in range(1, num_graphs):                 # B is tiny & static
        gid = gid + (rows >= starts_ref[g]).astype(jnp.int32)
    onehot = (gid == jax.lax.broadcasted_iota(
        jnp.int32, (tile_n, num_graphs), 1)).astype(jnp.float32)
    e1 = jnp.dot(onehot, eproj_ref[...], preferred_element_type=jnp.float32)

    # Dense1 on the (virtual) concat [h, embed_per_node]: the embed half plus
    # bias is already folded into e_proj, so only the h half is a real matmul.
    out = jnp.tanh(
        jnp.dot(h_ref[...], w1h_ref[...], preferred_element_type=jnp.float32) + e1)
    out = jnp.tanh(
        jnp.dot(out, w2_ref[...], preferred_element_type=jnp.float32) + b2_ref[...])
    out_ref[...] = jnp.dot(out, w3_ref[...],
                           preferred_element_type=jnp.float32) + b3_ref[...]


def init_params(key, in_dim, hidden_dim):
    """Deterministic nn.Linear-style init (uniform +-1/sqrt(fan_in))."""
    H, H2 = hidden_dim, 2 * hidden_dim
    ks = jax.random.split(key, 8)

    def lin(kw, kb, fan_in, fan_out):
        bound = 1.0 / np.sqrt(fan_in)
        w = jax.random.uniform(kw, (fan_in, fan_out), jnp.float32, -bound, bound)
        b = jax.random.uniform(kb, (1, fan_out), jnp.float32, -bound, bound)
        return w, b

    w_ne, b_ne = lin(ks[0], ks[1], in_dim, H)      # NodeEmbed
    w1, b1 = lin(ks[2], ks[3], H2, H2)             # Edges.Dense1
    w2, b2 = lin(ks[4], ks[5], H2, H2)             # Edges.Dense2
    w3, b3 = lin(ks[6], ks[7], H2, 2)              # Edges.Dense3
    return dict(w_ne=w_ne, b_ne=b_ne,
                w1h=w1[:H], w1e=w1[H:], b1=b1,
                w2=w2, b2=b2,
                w3=w3, b3=b3)


def batch_edge_forward(params, batch_num_nodes, last_node_batch, h, *, tile_n=4096):
    """batch_num_nodes: numpy int array (B,) = graphs.batch_num_nodes()."""
    batch_num_nodes = np.asarray(batch_num_nodes, dtype=np.int32)
    B = int(last_node_batch.shape[0])
    N, H = int(h.shape[0]), int(h.shape[1])
    H2 = 2 * H
    assert int(batch_num_nodes.sum()) == N

    # Host-side graph bookkeeping (static per batch shape; cache per-shape in a
    # real pipeline so the call path is re-trace free).
    starts_np = np.concatenate(
        [[0], np.cumsum(batch_num_nodes)[:-1]]).astype(np.int32)      # (B,) graph start rows
    graph_ids_np = np.repeat(np.arange(B, dtype=np.int32), batch_num_nodes)
    local_ids_np = np.arange(N, dtype=np.int32) - starts_np[graph_ids_np]
    starts = jnp.asarray(starts_np)
    graph_ids = jnp.asarray(graph_ids_np)
    local_ids = jnp.asarray(local_ids_np)

    # NodeEmbed once (tiny B x in_dim x H matmul) and fold it straight through
    # Dense1's embedding half + bias -> (B, 2H) table, kept VMEM-resident.
    node_embed = last_node_batch @ params["w_ne"] + params["b_ne"]     # (B, H)
    e_proj = node_embed @ params["w1e"] + params["b1"]                 # (B, 2H)

    # Node-dimension tiling: big tiles to amortize per-step overhead, rounded
    # to a multiple of 8; split so there are >=2 tiles when N allows (v7x
    # megacore).  No padding of the inputs — Pallas clips the partial block.
    tile_n = min(tile_n, _round_up(N, 8))
    if _ceil_div(N, tile_n) < 2 and N > 8:
        tile_n = _round_up(_ceil_div(N, 2), 8)
    num_tiles = _ceil_div(N, tile_n)

    res = lambda shp: pl.BlockSpec(shp, lambda i, starts: (0, 0))      # VMEM-resident

    grid_spec = pltpu.PrefetchScalarGridSpec(
        num_scalar_prefetch=1,
        grid=(num_tiles,),
        in_specs=[
            pl.BlockSpec((tile_n, H), lambda i, starts: (i, 0)),       # h tile
            res((B, H2)),                                              # e_proj
            res((H, H2)),                                              # w1h
            res((H2, H2)), res((1, H2)),                               # w2, b2
            res((H2, 2)), res((1, 2)),                                 # w3, b3
        ],
        out_specs=pl.BlockSpec((tile_n, 2), lambda i, starts: (i, 0)),
    )

    edges = pl.pallas_call(
        functools.partial(batch_edge_kernel, num_graphs=B, tile_n=tile_n),
        out_shape=jax.ShapeDtypeStruct((N, 2), jnp.float32),
        grid_spec=grid_spec,
        compiler_params=pltpu.CompilerParams(
            dimension_semantics=("parallel",),       # v7x: shard node tiles over 2 TCs
            vmem_limit_bytes=32 * 1024 * 1024),
    )(starts, h, e_proj,
      params["w1h"], params["w2"], params["b2"], params["w3"], params["b3"])

    # glue: pad_sequence(edges_per_graph, batch_first=True, padding_value=-10000)
    #       .flatten(1, -1)  ->  (B, max_nodes * 2)
    # TODO(synk): DGL batching/unbatching has no Pallas equivalent; done as an
    # XLA scatter using host-computed indices.
    max_nodes = int(batch_num_nodes.max())
    padded = jnp.full((B, max_nodes, 2), -10000.0, dtype=jnp.float32)
    padded = padded.at[graph_ids, local_ids].set(edges)
    return padded.reshape(B, max_nodes * 2)


def _reference(params, batch_num_nodes, last_node_batch, h):
    """Pure-JAX reference of the torch forward, for a correctness check."""
    batch_num_nodes = np.asarray(batch_num_nodes, dtype=np.int32)
    B = last_node_batch.shape[0]
    ne = last_node_batch @ params["w_ne"] + params["b_ne"]
    stacks = jnp.concatenate(
        [jnp.tile(ne[i][None, :], (int(batch_num_nodes[i]), 1)) for i in range(B)],
        axis=0)
    stack = jnp.concatenate([h, stacks], axis=1)
    w1 = jnp.concatenate([params["w1h"], params["w1e"]], axis=0)
    out = jnp.tanh(stack @ w1 + params["b1"])
    out = jnp.tanh(out @ params["w2"] + params["b2"])
    out = out @ params["w3"] + params["b3"]
    max_nodes = int(batch_num_nodes.max())
    rows, off = [], 0
    for n in batch_num_nodes:
        g = out[off:off + int(n)]
        pad = jnp.full((max_nodes - int(n), 2), -10000.0, jnp.float32)
        rows.append(jnp.concatenate([g, pad], axis=0))
        off += int(n)
    return jnp.stack(rows, axis=0).reshape(B, max_nodes * 2)


if __name__ == "__main__":
    in_dim, hidden_dim = 6, 8
    B = 2
    batch_num_nodes = np.array([3, 5], dtype=np.int32)   # graphs.batch_num_nodes()
    N = int(batch_num_nodes.sum())

    key = jax.random.PRNGKey(0)
    kp, kx, kh = jax.random.split(key, 3)
    params = init_params(kp, in_dim, hidden_dim)
    last_node_batch = jax.random.normal(kx, (B, in_dim), jnp.float32)
    h = jax.random.normal(kh, (N, hidden_dim), jnp.float32)

    out = batch_edge_forward(params, batch_num_nodes, last_node_batch, h)
    out = jax.block_until_ready(out)

    ref = _reference(params, batch_num_nodes, last_node_batch, h)
    np.testing.assert_allclose(np.asarray(out), np.asarray(ref),
                               rtol=1e-5, atol=1e-5)
    print("KERNEL_OK")
</pallas_src>

<mosaic_0001>
module attributes {stable_mosaic.version = 11 : i64} {
  func.func @batch_edge_kernel(%arg0: i32, %arg1: memref<2xi32, #tpu.memory_space<smem>>, %arg2: memref<8x8xf32, #tpu.memory_space<vmem>>, %arg3: memref<2x16xf32, #tpu.memory_space<vmem>>, %arg4: memref<8x16xf32, #tpu.memory_space<vmem>>, %arg5: memref<16x16xf32, #tpu.memory_space<vmem>>, %arg6: memref<1x16xf32, #tpu.memory_space<vmem>>, %arg7: memref<16x2xf32, #tpu.memory_space<vmem>>, %arg8: memref<1x2xf32, #tpu.memory_space<vmem>>, %arg9: memref<8x2xf32, #tpu.memory_space<vmem>>) attributes {dimension_semantics = [#tpu.dimension_semantics<parallel>], iteration_bounds = array<i64: 1>, scalar_prefetch = 1 : i64, scratch_operands = 0 : i64, tpu.core_type = #tpu.core_type<tc>, window_params = [{transform_indices = @transform_0, window_bounds = array<i64: 8, 8>}, {pipeline_mode = #tpu.pipeline_mode<synchronous>, transform_indices = @transform_1, window_bounds = array<i64: 2, 16>}, {pipeline_mode = #tpu.pipeline_mode<synchronous>, transform_indices = @transform_2, window_bounds = array<i64: 8, 16>}, {pipeline_mode = #tpu.pipeline_mode<synchronous>, transform_indices = @transform_3, window_bounds = array<i64: 16, 16>}, {pipeline_mode = #tpu.pipeline_mode<synchronous>, transform_indices = @transform_4, window_bounds = array<i64: 1, 16>}, {pipeline_mode = #tpu.pipeline_mode<synchronous>, transform_indices = @transform_5, window_bounds = array<i64: 16, 2>}, {pipeline_mode = #tpu.pipeline_mode<synchronous>, transform_indices = @transform_6, window_bounds = array<i64: 1, 2>}, {transform_indices = @transform_7, window_bounds = array<i64: 8, 2>}]} {
    %c8_i32 = arith.constant 8 : i32
    %0 = arith.muli %arg0, %c8_i32 : i32
    %1 = tpu.iota {dimensions = array<i32: 0>} : vector<8x1xi32>
    %2 = vector.broadcast %0 : i32 to vector<8x1xi32>
    %3 = arith.addi %2, %1 : vector<8x1xi32>
    %c0_i32 = arith.constant 0 : i32
    %4 = vector.broadcast %c0_i32 : i32 to vector<8x1xi32>
    %c1 = arith.constant 1 : index
    %5 = memref.load %arg1[%c1] : memref<2xi32, #tpu.memory_space<smem>>
    %6 = vector.broadcast %5 : i32 to vector<8x1xi32>
    %7 = arith.cmpi sge, %3, %6 : vector<8x1xi32>
    %8 = arith.extui %7 : vector<8x1xi1> to vector<8x1xi32>
    %9 = arith.addi %4, %8 : vector<8x1xi32>
    %10 = tpu.iota {dimensions = array<i32: 1>} : vector<8x2xi32>
    %11 = vector.broadcast %9 : vector<8x1xi32> to vector<8x2xi32>
    %12 = arith.cmpi eq, %11, %10 : vector<8x2xi32>
    %13 = arith.extui %12 : vector<8x2xi1> to vector<8x2xi32>
    %14 = arith.sitofp %13 : vector<8x2xi32> to vector<8x2xf32>
    %c0 = arith.constant 0 : index
    %c0_0 = arith.constant 0 : index
    %15 = vector.load %arg3[%c0, %c0_0] : memref<2x16xf32, #tpu.memory_space<vmem>>, vector<2x16xf32>
    %cst = arith.constant dense<0.000000e+00> : vector<8x16xf32>
    %16 = tpu.matmul %14, %15, %cst {dimension_numbers = #tpu.dot_dimension_numbers<[1], [0], [0], [1], [0, 0, 1, 1], [], []>} : vector<8x2xf32>, vector<2x16xf32>, vector<8x16xf32> -> vector<8x16xf32>
    %c0_1 = arith.constant 0 : index
    %c0_2 = arith.constant 0 : index
    %17 = vector.load %arg2[%c0_1, %c0_2] : memref<8x8xf32, #tpu.memory_space<vmem>>, vector<8x8xf32>
    %c0_3 = arith.constant 0 : index
    %c0_4 = arith.constant 0 : index
    %18 = vector.load %arg4[%c0_3, %c0_4] : memref<8x16xf32, #tpu.memory_space<vmem>>, vector<8x16xf32>
    %cst_5 = arith.constant dense<0.000000e+00> : vector<8x16xf32>
    %19 = tpu.matmul %17, %18, %cst_5 {dimension_numbers = #tpu.dot_dimension_numbers<[1], [0], [0], [1], [0, 0, 1, 1], [], []>} : vector<8x8xf32>, vector<8x16xf32>, vector<8x16xf32> -> vector<8x16xf32>
    %20 = arith.addf %19, %16 : vector<8x16xf32>
    %21 = math.tanh %20 : vector<8x16xf32>
    %c0_6 = arith.constant 0 : index
    %c0_7 = arith.constant 0 : index
    %22 = vector.load %arg5[%c0_6, %c0_7] : memref<16x16xf32, #tpu.memory_space<vmem>>, vector<16x16xf32>
    %cst_8 = arith.constant dense<0.000000e+00> : vector<8x16xf32>
    %23 = tpu.matmul %21, %22, %cst_8 {dimension_numbers = #tpu.dot_dimension_numbers<[1], [0], [0], [1], [0, 0, 1, 1], [], []>} : vector<8x16xf32>, vector<16x16xf32>, vector<8x16xf32> -> vector<8x16xf32>
    %c0_9 = arith.constant 0 : index
    %c0_10 = arith.constant 0 : index
    %24 = vector.load %arg6[%c0_9, %c0_10] : memref<1x16xf32, #tpu.memory_space<vmem>>, vector<1x16xf32>
    %25 = vector.broadcast %24 : vector<1x16xf32> to vector<8x16xf32>
    %26 = arith.addf %23, %25 : vector<8x16xf32>
    %27 = math.tanh %26 : vector<8x16xf32>
    %c0_11 = arith.constant 0 : index
    %c0_12 = arith.constant 0 : index
    %28 = vector.load %arg7[%c0_11, %c0_12] : memref<16x2xf32, #tpu.memory_space<vmem>>, vector<16x2xf32>
    %cst_13 = arith.constant dense<0.000000e+00> : vector<8x2xf32>
    %29 = tpu.matmul %27, %28, %cst_13 {dimension_numbers = #tpu.dot_dimension_numbers<[1], [0], [0], [1], [0, 0, 1, 1], [], []>} : vector<8x16xf32>, vector<16x2xf32>, vector<8x2xf32> -> vector<8x2xf32>
    %c0_14 = arith.constant 0 : index
    %c0_15 = arith.constant 0 : index
    %30 = vector.load %arg8[%c0_14, %c0_15] : memref<1x2xf32, #tpu.memory_space<vmem>>, vector<1x2xf32>
    %31 = vector.broadcast %30 : vector<1x2xf32> to vector<8x2xf32>
    %32 = arith.addf %29, %31 : vector<8x2xf32>
    %c0_16 = arith.constant 0 : index
    %c0_17 = arith.constant 0 : index
    %33 = vector.load %arg9[%c0_16, %c0_17] : memref<8x2xf32, #tpu.memory_space<vmem>>, vector<8x2xf32>
    tpu.vector_store %arg9[%c0_16, %c0_17], %32 {strides = array<i32>} : memref<8x2xf32, #tpu.memory_space<vmem>>, vector<8x2xf32>,
    return
  }
  func.func @transform_0(%arg0: i32, %arg1: memref<2xi32, #tpu.memory_space<smem>>) -> (i32, i32) {
    %c0_i32 = arith.constant 0 : i32
    %c0_i32_0 = arith.constant 0 : i32
    return %arg0, %c0_i32 : i32, i32
  }
  func.func @transform_1(%arg0: i32, %arg1: memref<2xi32, #tpu.memory_space<smem>>) -> (i32, i32) {
    %c0_i32 = arith.constant 0 : i32
    %c0_i32_0 = arith.constant 0 : i32
    %c0_i32_1 = arith.constant 0 : i32
    return %c0_i32, %c0_i32_0 : i32, i32
  }
  func.func @transform_2(%arg0: i32, %arg1: memref<2xi32, #tpu.memory_space<smem>>) -> (i32, i32) {
    %c0_i32 = arith.constant 0 : i32
    %c0_i32_0 = arith.constant 0 : i32
    %c0_i32_1 = arith.constant 0 : i32
    return %c0_i32, %c0_i32_0 : i32, i32
  }
  func.func @transform_3(%arg0: i32, %arg1: memref<2xi32, #tpu.memory_space<smem>>) -> (i32, i32) {
    %c0_i32 = arith.constant 0 : i32
    %c0_i32_0 = arith.constant 0 : i32
    %c0_i32_1 = arith.constant 0 : i32
    return %c0_i32, %c0_i32_0 : i32, i32
  }
  func.func @transform_4(%arg0: i32, %arg1: memref<2xi32, #tpu.memory_space<smem>>) -> (i32, i32) {
    %c0_i32 = arith.constant 0 : i32
    %c0_i32_0 = arith.constant 0 : i32
    %c0_i32_1 = arith.constant 0 : i32
    return %c0_i32, %c0_i32_0 : i32, i32
  }
  func.func @transform_5(%arg0: i32, %arg1: memref<2xi32, #tpu.memory_space<smem>>) -> (i32, i32) {
    %c0_i32 = arith.constant 0 : i32
    %c0_i32_0 = arith.constant 0 : i32
    %c0_i32_1 = arith.constant 0 : i32
    return %c0_i32, %c0_i32_0 : i32, i32
  }
  func.func @transform_6(%arg0: i32, %arg1: memref<2xi32, #tpu.memory_space<smem>>) -> (i32, i32) {
    %c0_i32 = arith.constant 0 : i32
    %c0_i32_0 = arith.constant 0 : i32
    %c0_i32_1 = arith.constant 0 : i32
    return %c0_i32, %c0_i32_0 : i32, i32
  }
  func.func @transform_7(%arg0: i32, %arg1: memref<2xi32, #tpu.memory_space<smem>>) -> (i32, i32) {
    %c0_i32 = arith.constant 0 : i32
    %c0_i32_0 = arith.constant 0 : i32
    return %arg0, %c0_i32 : i32, i32
  }
}

</mosaic_0001>

<llo_original>
// kernel: tpu_custom_call.1
$region0: #{tpu_custom_call.1}
  #allocation0 [shape = 'u32[]', space=smem, size = 0x4, offset = 0x4, fixed_abs, tag = 'smem constant byte address 0x4 - core index']
  #allocation1 [shape = 'u32[144,128]{1,0:T(1,128)}', space=vmem, size = 0x12000, scoped, tag = 'internal scratch']
  #allocation2 [shape = 's32[1]{0}', space=sflag, size = 0x4, scoped, tag = 'scoped memory for tpu_custom_call.1']
  #allocation3 [shape = 'u8[512]{0}', space=smem, size = 0x200, scoped, tag = 'prefetched SMEM operand 0']
  %s0 = inlined_call_operand.vmem [shape: s32[2], index: 0, kind: input, shape index: {}]
  %s1 = inlined_call_operand.vmem [shape: f32[8,8], index: 1, kind: input, shape index: {}]
  %s2 = inlined_call_operand.hbm [shape: f32[2,16], index: 2, kind: input, shape index: {}]
  %s3 = inlined_call_operand.vmem [shape: f32[8,16], index: 3, kind: input, shape index: {}]
  %s4 = inlined_call_operand.vmem [shape: f32[16,16], index: 4, kind: input, shape index: {}]
  %s5 = inlined_call_operand.vmem [shape: f32[1,16], index: 5, kind: input, shape index: {}]
  %s6 = inlined_call_operand.vmem [shape: f32[16,2], index: 6, kind: input, shape index: {}]
  %s7 = inlined_call_operand.vmem [shape: f32[1,2], index: 7, kind: input, shape index: {}]
  %s8 = inlined_call_operand.vmem [shape: f32[8,2], index: 8, kind: output, shape index: {}]
  %s9 = sld [smem:[#allocation0]]
  $region42: #{tpu_custom_call.1} parent=0
    _
  %s11 = ssub.s32 1, %s9
  %s12 = scalar_select 0, %s11, %s9
  %s13 = sshll.u32 %s0, 4
  %s14 = int_to_ptr.vmem [resolvable:$true] %s13
  %16 = dma.vmem_to_smem %s14, 16, [#allocation3], [#allocation2]
  %17 = dma.done [#allocation2], 16
  %18 = sfence
  $region1: #{tpu_custom_call.1} parent=0
    #allocation4 [shape = 'u8[1024]{0}', space=vmem, size = 0x400, scoped, tag = 'input window, operand 2, single buffered']
    #allocation5 [shape = 's32[1]{0}', space=sflag, size = 0x4, scoped, tag = 'scoped memory for tpu_custom_call.1']
    %19 = vsyncpa [#allocation5], 0
    // Predicated region
    $region2: #{tpu_custom_call.1} parent=1 // pred_check
      _
    $region3: #{tpu_custom_call.1} parent=1 // pred_check_branch
      %21 = sbr.rel (0) target = $region5
    $region4: #{tpu_custom_call.1} parent=1 // pred_region
      _
    $region5: #{tpu_custom_call.1} parent=1 // pred_fallthru
      _
    // Predicated region
    $region6: #{tpu_custom_call.1} parent=1 // pred_check
      _
    $region7: #{tpu_custom_call.1} parent=1 // pred_check_branch
      %23 = sbr.rel (0) target = $region9
    $region8: #{tpu_custom_call.1} parent=1 // pred_region
      %s25 = ssub.s32 32, 32
      %26 = vsyncadd [#allocation5], %s25
      %s28 = sshll.u32 [#allocation4], 4
      %s29 = int_to_ptr.vmem [resolvable:$true] %s28
      %31 = dma.hbm_to_vmem [thread:$0]  %s2, 32, %s29, [#allocation5]
    $region9: #{tpu_custom_call.1} parent=1 // pred_fallthru
      _
    // Predicated region
    $region10: #{tpu_custom_call.1} parent=1 // pred_check
      _
    $region11: #{tpu_custom_call.1} parent=1 // pred_check_branch
      %33 = sbr.rel (0) target = $region13
    $region12: #{tpu_custom_call.1} parent=1 // pred_region
      _
    $region13: #{tpu_custom_call.1} parent=1 // pred_fallthru
      _
    // Predicated region
    $region14: #{tpu_custom_call.1} parent=1 // pred_check
      _
    $region15: #{tpu_custom_call.1} parent=1 // pred_check_branch
      %35 = sbr.rel (0) target = $region17
    $region16: #{tpu_custom_call.1} parent=1 // pred_region
      _
    $region17: #{tpu_custom_call.1} parent=1 // pred_fallthru
      _
    // Predicated region
    $region18: #{tpu_custom_call.1} parent=1 // pred_check
      _
    $region19: #{tpu_custom_call.1} parent=1 // pred_check_branch
      %37 = sbr.rel (0) target = $region21
    $region20: #{tpu_custom_call.1} parent=1 // pred_region
      _
    $region21: #{tpu_custom_call.1} parent=1 // pred_fallthru
      _
    // Predicated region
    $region22: #{tpu_custom_call.1} parent=1 // pred_check
      _
    $region23: #{tpu_custom_call.1} parent=1 // pred_check_branch
      %39 = sbr.rel (0) target = $region25
    $region24: #{tpu_custom_call.1} parent=1 // pred_region
      _
    $region25: #{tpu_custom_call.1} parent=1 // pred_fallthru
      _
    // Predicated region
    $region26: #{tpu_custom_call.1} parent=1 // pred_check
      _
    $region27: #{tpu_custom_call.1} parent=1 // pred_check_branch
      %41 = sbr.rel (0) target = $region29
    $region28: #{tpu_custom_call.1} parent=1 // pred_region
      _
    $region29: #{tpu_custom_call.1} parent=1 // pred_fallthru
      _
    // Predicated region
    $region30: #{tpu_custom_call.1} parent=1 // pred_check
      _
    $region31: #{tpu_custom_call.1} parent=1 // pred_check_branch
      %43 = sbr.rel (0) target = $region33
    $region32: #{tpu_custom_call.1} parent=1 // pred_region
      %44 = dma.done [#allocation5], 32
    $region33: #{tpu_custom_call.1} parent=1 // pred_fallthru
      _
    %s45 = smul.u32 0, 8
    %v46 = vlaneseq
    %v47 = vshrl.u32 %v46, 7
    %v48 = vstv %s45
    %v49 = vadd.s32 %v48, %v47
    %s50 = sld [smem:[#allocation3 + $0x1]]
    %v51 = vstv %s50
    %vm52 = vcmp.ge.s32.totalorder %v49, %v51
    %v53 = vsel %vm52, 1, 0
    %v54 = vlaneseq
    %v55 = vand.u32 %v54, 127
    %vm56 = vcmp.eq.s32.totalorder %v53, %v55
    %v57 = vsel %vm56, 1, 0
    %v58 = vcvt.s32.f32 %v57
    %v59 = vld [vmem:[#allocation4] sm:$0x3]
    %vm60 = vcmask 15360
    %v62 = vsel %vm60, %v58, 0
    %vm64 = vcmask 1041408
    %v66 = vsel %vm64, %v59, 0
    %68 = vmatprep.subr.mxu0 0.0
    %69 = vmatpush1.msra.mxu0 %v66
    %70 = vmatprep.subr.mxu0 0.0
    %71 = vmatpush1.msra.mxu0 0.0
    %72 = vmatprep.subr.mxu0 0.0
    %73 = vmatpush1.msra.mxu0 0.0
    %74 = vmatprep.subr.mxu0 0.0
    %75 = vmatpush1.msra.mxu0 0.0
    %76 = vmatprep.subr.mxu0 0.0
    %77 = vmatpush1.msra.mxu0 0.0
    %78 = vmatprep.subr.mxu0 0.0
    %79 = vmatpush1.msra.mxu0 0.0
    %80 = vmatprep.subr.mxu0 0.0
    %81 = vmatpush1.msra.mxu0 0.0
    %82 = vmatprep.subr.mxu0 0.0
    %83 = vmatpush1.msra.mxu0 0.0
    %84 = vmatprep.subr.mxu0 0.0
    %85 = vmatpush1.msra.mxu0 0.0
    %86 = vmatprep.subr.mxu0 0.0
    %87 = vmatpush1.msra.mxu0 0.0
    %88 = vmatprep.subr.mxu0 0.0
    %89 = vmatpush1.msra.mxu0 0.0
    %90 = vmatprep.subr.mxu0 0.0
    %91 = vmatpush1.msra.mxu0 0.0
    %92 = vmatprep.subr.mxu0 0.0
    %93 = vmatpush1.msra.mxu0 0.0
    %94 = vmatprep.subr.mxu0 0.0
    %95 = vmatpush1.msra.mxu0 0.0
    %96 = vmatprep.subr.mxu0 0.0
    %97 = vmatpush1.msra.mxu0 0.0
    %98 = vmatprep.subr.mxu0 0.0
    %99 = vmatpush1.msra.mxu0 0.0
    %100 = vmatprep.subr.mxu0 0.0
    %101 = vmatpush1.msra.mxu0 0.0
    %102 = vmatprep.subr.mxu0 0.0
    %103 = vmatpush1.msra.mxu0 0.0
    %104 = vmatprep.subr.mxu0 0.0
    %105 = vmatpush1.msra.mxu0 0.0
    %106 = vmatprep.subr.mxu0 0.0
    %107 = vmatpush1.msra.mxu0 0.0
    %108 = vmatprep.subr.mxu0 0.0
    %109 = vmatpush1.msra.mxu0 0.0
    %110 = vmatprep.subr.mxu0 0.0
    %111 = vmatpush1.msra.mxu0 0.0
    %112 = vmatprep.subr.mxu0 0.0
    %113 = vmatpush1.msra.mxu0 0.0
    %114 = vmatprep.subr.mxu0 0.0
    %115 = vmatpush1.msra.mxu0 0.0
    %116 = vmatprep.subr.mxu0 0.0
    %117 = vmatpush1.msra.mxu0 0.0
    %118 = vmatprep.subr.mxu0 0.0
    %119 = vmatpush1.msra.mxu0 0.0
    %120 = vmatprep.subr.mxu0 0.0
    %121 = vmatpush1.msra.mxu0 0.0
    %122 = vmatprep.subr.mxu0 0.0
    %123 = vmatpush1.msra.mxu0 0.0
    %124 = vmatprep.subr.mxu0 0.0
    %125 = vmatpush1.msra.mxu0 0.0
    %126 = vmatprep.subr.mxu0 0.0
    %127 = vmatpush1.msra.mxu0 0.0
    %128 = vmatprep.subr.mxu0 0.0
    %129 = vmatpush1.msra.mxu0 0.0
    %130 = vmatprep.subr.mxu0 0.0
    %131 = vmatpush1.msra.mxu0 0.0
    %132 = vmatprep.mubr.f32.mxu0 0.0
    %133 = vmatmul.mubr.f32.gmra.mrb[0].mxu0 %v62
    %v134 = vpop.f32.mrb[0].mxu0
    %v135 = vadd.f32 0.0, %v134
    %v136 = vpop.f32.mrb[0].mxu0
    %137 = vdwg.mxu0
    %v138 = vld [vmem:[%s1] sm:$0xff]
    %v139 = vld [vmem:[%s3] sm:$0xff]
    %vm140 = vcmask 64512
    %v142 = vsel %vm140, %v138, 0
    %144 = vmatprep.subr.mxu0 0.0
    %145 = vmatpush1.msra.mxu0 %v139
    %146 = vmatprep.subr.mxu0 0.0
    %147 = vmatpush1.msra.mxu0 0.0
    %148 = vmatprep.subr.mxu0 0.0
    %149 = vmatpush1.msra.mxu0 0.0
    %150 = vmatprep.subr.mxu0 0.0
    %151 = vmatpush1.msra.mxu0 0.0
    %152 = vmatprep.subr.mxu0 0.0
    %153 = vmatpush1.msra.mxu0 0.0
    %154 = vmatprep.subr.mxu0 0.0
    %155 = vmatpush1.msra.mxu0 0.0
    %156 = vmatprep.subr.mxu0 0.0
    %157 = vmatpush1.msra.mxu0 0.0
    %158 = vmatprep.subr.mxu0 0.0
    %159 = vmatpush1.msra.mxu0 0.0
    %160 = vmatprep.subr.mxu0 0.0
    %161 = vmatpush1.msra.mxu0 0.0
    %162 = vmatprep.subr.mxu0 0.0
    %163 = vmatpush1.msra.mxu0 0.0
    %164 = vmatprep.subr.mxu0 0.0
    %165 = vmatpush1.msra.mxu0 0.0
    %166 = vmatprep.subr.mxu0 0.0
    %167 = vmatpush1.msra.mxu0 0.0
    %168 = vmatprep.subr.mxu0 0.0
    %169 = vmatpush1.msra.mxu0 0.0
    %170 = vmatprep.subr.mxu0 0.0
    %171 = vmatpush1.msra.mxu0 0.0
    %172 = vmatprep.subr.mxu0 0.0
    %173 = vmatpush1.msra.mxu0 0.0
    %174 = vmatprep.subr.mxu0 0.0
    %175 = vmatpush1.msra.mxu0 0.0
    %176 = vmatprep.subr.mxu0 0.0
    %177 = vmatpush1.msra.mxu0 0.0
    %178 = vmatprep.subr.mxu0 0.0
    %179 = vmatpush1.msra.mxu0 0.0
    %180 = vmatprep.subr.mxu0 0.0
    %181 = vmatpush1.msra.mxu0 0.0
    %182 = vmatprep.subr.mxu0 0.0
    %183 = vmatpush1.msra.mxu0 0.0
    %184 = vmatprep.subr.mxu0 0.0
    %185 = vmatpush1.msra.mxu0 0.0
    %186 = vmatprep.subr.mxu0 0.0
    %187 = vmatpush1.msra.mxu0 0.0
    %188 = vmatprep.subr.mxu0 0.0
    %189 = vmatpush1.msra.mxu0 0.0
    %190 = vmatprep.subr.mxu0 0.0
    %191 = vmatpush1.msra.mxu0 0.0
    %192 = vmatprep.subr.mxu0 0.0
    %193 = vmatpush1.msra.mxu0 0.0
    %194 = vmatprep.subr.mxu0 0.0
    %195 = vmatpush1.msra.mxu0 0.0
    %196 = vmatprep.subr.mxu0 0.0
    %197 = vmatpush1.msra.mxu0 0.0
    %198 = vmatprep.subr.mxu0 0.0
    %199 = vmatpush1.msra.mxu0 0.0
    %200 = vmatprep.subr.mxu0 0.0
    %201 = vmatpush1.msra.mxu0 0.0
    %202 = vmatprep.subr.mxu0 0.0
    %203 = vmatpush1.msra.mxu0 0.0
    %204 = vmatprep.subr.mxu0 0.0
    %205 = vmatpush1.msra.mxu0 0.0
    %206 = vmatprep.subr.mxu0 0.0
    %207 = vmatpush1.msra.mxu0 0.0
    %208 = vmatprep.mubr.f32.mxu0 0.0
    %209 = vmatmul.mubr.f32.gmra.mrb[0].mxu0 %v142
    %v210 = vpop.f32.mrb[0].mxu0
    %v211 = vadd.f32 %v135, %v210
    %v212 = vpop.f32.mrb[0].mxu0
    %213 = vdwg.mxu0
    %v214 = vtanh.pop %v211
    %v215 = vld [vmem:[%s4] sm:$0xff]
    %v216 = vld [vmem:[%s4 + $0x8] sm:$0xff]
    %v217 = vld [vmem:[%s5] sm:$0x1]
    %v219 = vlaneseq
    %v220 = vshrl.u32 %v219, 7
    %v221 = vsub.s32 0, %v220
    %v222 = vrot.slane %v217, %v221
    %vm224 = vcmask 130048
    %v226 = vsel %vm224, %v214, 0
    %228 = vmatprep.subr.mxu0 0.0
    %229 = vmatpush1.msra.mxu0 %v215
    %230 = vmatprep.subr.mxu0 0.0
    %231 = vmatpush1.msra.mxu0 %v216
    %232 = vmatprep.subr.mxu0 0.0
    %233 = vmatpush1.msra.mxu0 0.0
    %234 = vmatprep.subr.mxu0 0.0
    %235 = vmatpush1.msra.mxu0 0.0
    %236 = vmatprep.subr.mxu0 0.0
    %237 = vmatpush1.msra.mxu0 0.0
    %238 = vmatprep.subr.mxu0 0.0
    %239 = vmatpush1.msra.mxu0 0.0
    %240 = vmatprep.subr.mxu0 0.0
    %241 = vmatpush1.msra.mxu0 0.0
    %242 = vmatprep.subr.mxu0 0.0
    %243 = vmatpush1.msra.mxu0 0.0
    %244 = vmatprep.subr.mxu0 0.0
    %245 = vmatpush1.msra.mxu0 0.0
    %246 = vmatprep.subr.mxu0 0.0
    %247 = vmatpush1.msra.mxu0 0.0
    %248 = vmatprep.subr.mxu0 0.0
    %249 = vmatpush1.msra.mxu0 0.0
    %250 = vmatprep.subr.mxu0 0.0
    %251 = vmatpush1.msra.mxu0 0.0
    %252 = vmatprep.subr.mxu0 0.0
    %253 = vmatpush1.msra.mxu0 0.0
    %254 = vmatprep.subr.mxu0 0.0
    %255 = vmatpush1.msra.mxu0 0.0
    %256 = vmatprep.subr.mxu0 0.0
    %257 = vmatpush1.msra.mxu0 0.0
    %258 = vmatprep.subr.mxu0 0.0
    %259 = vmatpush1.msra.mxu0 0.0
    %260 = vmatprep.subr.mxu0 0.0
    %261 = vmatpush1.msra.mxu0 0.0
    %262 = vmatprep.subr.mxu0 0.0
    %263 = vmatpush1.msra.mxu0 0.0
    %264 = vmatprep.subr.mxu0 0.0
    %265 = vmatpush1.msra.mxu0 0.0
    %266 = vmatprep.subr.mxu0 0.0
    %267 = vmatpush1.msra.mxu0 0.0
    %268 = vmatprep.subr.mxu0 0.0
    %269 = vmatpush1.msra.mxu0 0.0
    %270 = vmatprep.subr.mxu0 0.0
    %271 = vmatpush1.msra.mxu0 0.0
    %272 = vmatprep.subr.mxu0 0.0
    %273 = vmatpush1.msra.mxu0 0.0
    %274 = vmatprep.subr.mxu0 0.0
    %275 = vmatpush1.msra.mxu0 0.0
    %276 = vmatprep.subr.mxu0 0.0
    %277 = vmatpush1.msra.mxu0 0.0
    %278 = vmatprep.subr.mxu0 0.0
    %279 = vmatpush1.msra.mxu0 0.0
    %280 = vmatprep.subr.mxu0 0.0
    %281 = vmatpush1.msra.mxu0 0.0
    %282 = vmatprep.subr.mxu0 0.0
    %283 = vmatpush1.msra.mxu0 0.0
    %284 = vmatprep.subr.mxu0 0.0
    %285 = vmatpush1.msra.mxu0 0.0
    %286 = vmatprep.subr.mxu0 0.0
    %287 = vmatpush1.msra.mxu0 0.0
    %288 = vmatprep.subr.mxu0 0.0
    %289 = vmatpush1.msra.mxu0 0.0
    %290 = vmatprep.subr.mxu0 0.0
    %291 = vmatpush1.msra.mxu0 0.0
    %292 = vmatprep.mubr.f32.mxu0 0.0
    %293 = vmatmul.mubr.f32.gmra.mrb[0].mxu0 %v226
    %v294 = vpop.f32.mrb[0].mxu0
    %v295 = vadd.f32 %v222, %v294
    %v296 = vpop.f32.mrb[0].mxu0
    %297 = vdwg.mxu0
    %v298 = vtanh.pop %v295
    %v299 = vld [vmem:[%s6] sm:$0xff]
    %v300 = vld [vmem:[%s6 + $0x8] sm:$0xff]
    %v301 = vld [vmem:[%s7] sm:$0x1]
    %v303 = vlaneseq
    %v304 = vshrl.u32 %v303, 7
    %v305 = vsub.s32 0, %v304
    %v306 = vrot.slane %v301, %v305
    %v309 = vsel %vm224, %v298, 0
    %311 = vmatprep.subr.mxu0 0.0
    %312 = vmatpush1.msra.mxu0 %v299
    %313 = vmatprep.subr.mxu0 0.0
    %314 = vmatpush1.msra.mxu0 %v300
    %315 = vmatprep.subr.mxu0 0.0
    %316 = vmatpush1.msra.mxu0 0.0
    %317 = vmatprep.subr.mxu0 0.0
    %318 = vmatpush1.msra.mxu0 0.0
    %319 = vmatprep.subr.mxu0 0.0
    %320 = vmatpush1.msra.mxu0 0.0
    %321 = vmatprep.subr.mxu0 0.0
    %322 = vmatpush1.msra.mxu0 0.0
    %323 = vmatprep.subr.mxu0 0.0
    %324 = vmatpush1.msra.mxu0 0.0
    %325 = vmatprep.subr.mxu0 0.0
    %326 = vmatpush1.msra.mxu0 0.0
    %327 = vmatprep.subr.mxu0 0.0
    %328 = vmatpush1.msra.mxu0 0.0
    %329 = vmatprep.subr.mxu0 0.0
    %330 = vmatpush1.msra.mxu0 0.0
    %331 = vmatprep.subr.mxu0 0.0
    %332 = vmatpush1.msra.mxu0 0.0
    %333 = vmatprep.subr.mxu0 0.0
    %334 = vmatpush1.msra.mxu0 0.0
    %335 = vmatprep.subr.mxu0 0.0
    %336 = vmatpush1.msra.mxu0 0.0
    %337 = vmatprep.subr.mxu0 0.0
    %338 = vmatpush1.msra.mxu0 0.0
    %339 = vmatprep.subr.mxu0 0.0
    %340 = vmatpush1.msra.mxu0 0.0
    %341 = vmatprep.subr.mxu0 0.0
    %342 = vmatpush1.msra.mxu0 0.0
    %343 = vmatprep.subr.mxu0 0.0
    %344 = vmatpush1.msra.mxu0 0.0
    %345 = vmatprep.subr.mxu0 0.0
    %346 = vmatpush1.msra.mxu0 0.0
    %347 = vmatprep.subr.mxu0 0.0
    %348 = vmatpush1.msra.mxu0 0.0
    %349 = vmatprep.subr.mxu0 0.0
    %350 = vmatpush1.msra.mxu0 0.0
    %351 = vmatprep.subr.mxu0 0.0
    %352 = vmatpush1.msra.mxu0 0.0
    %353 = vmatprep.subr.mxu0 0.0
    %354 = vmatpush1.msra.mxu0 0.0
    %355 = vmatprep.subr.mxu0 0.0
    %356 = vmatpush1.msra.mxu0 0.0
    %357 = vmatprep.subr.mxu0 0.0
    %358 = vmatpush1.msra.mxu0 0.0
    %359 = vmatprep.subr.mxu0 0.0
    %360 = vmatpush1.msra.mxu0 0.0
    %361 = vmatprep.subr.mxu0 0.0
    %362 = vmatpush1.msra.mxu0 0.0
    %363 = vmatprep.subr.mxu0 0.0
    %364 = vmatpush1.msra.mxu0 0.0
    %365 = vmatprep.subr.mxu0 0.0
    %366 = vmatpush1.msra.mxu0 0.0
    %367 = vmatprep.subr.mxu0 0.0
    %368 = vmatpush1.msra.mxu0 0.0
    %369 = vmatprep.subr.mxu0 0.0
    %370 = vmatpush1.msra.mxu0 0.0
    %371 = vmatprep.subr.mxu0 0.0
    %372 = vmatpush1.msra.mxu0 0.0
    %373 = vmatprep.subr.mxu0 0.0
    %374 = vmatpush1.msra.mxu0 0.0
    %375 = vmatprep.mubr.f32.mxu0 0.0
    %376 = vmatmul.mubr.f32.gmra.mrb[0].mxu0 %v309
    %v377 = vpop.f32.mrb[0].mxu0
    %v378 = vadd.f32 %v306, %v377
    %v379 = vpop.f32.mrb[0].mxu0
    %380 = vdwg.mxu0
    %381 = vst.msk [vmem:[%s8] sm:$0xff] %vm60, %v378
    // Predicated region
    $region34: #{tpu_custom_call.1} parent=1 // pred_check
      _
    $region35: #{tpu_custom_call.1} parent=1 // pred_check_branch
      %383 = sbr.rel (0) target = $region37
    $region36: #{tpu_custom_call.1} parent=1 // pred_region
      _
    $region37: #{tpu_custom_call.1} parent=1 // pred_fallthru
      _
    // Predicated region
    $region38: #{tpu_custom_call.1} parent=1 // pred_check
      _
    $region39: #{tpu_custom_call.1} parent=1 // pred_check_branch
      %385 = sbr.rel (0) target = $region41
    $region40: #{tpu_custom_call.1} parent=1 // pred_region
      _
    $region41: #{tpu_custom_call.1} parent=1 // pred_fallthru
      _
    %386 = vsyncpa [#allocation5], 1

</llo_original>
